<compile_context>
chip_gen: v7x
topology: tpu7x:2x2x1
jax: 0.10.0
libtpu: 0.0.40
codegen_flags: <defaults>
</compile_context>

<pallas_src>
import functools

import jax
import jax.numpy as jnp
from jax.experimental import pallas as pl
from jax.experimental.pallas import tpu as pltpu


def _round_up(x, m):
    return (x + m - 1) // m * m


def _cdiv(a, b):
    return -(-a // b)


def _choose_tiles(B, tile_b):
    """Batch tile TB (multiple of 8) and grid length with a non-empty last tile."""
    n_steps = max(1, _cdiv(B, tile_b))
    if n_steps == 1 and B > 8:
        n_steps = 2                       # let both v7x TensorCores work
    TB = _round_up(_cdiv(B, n_steps), 8)
    n_steps = _cdiv(B, TB)                # last tile always has >=1 valid row
    return TB, n_steps


def _policy_kernel(obs_ref, act_ref, w1_ref, b1_ref, w2_ref, b2_ref,
                   w3_ref, b3_ref, out_ref, *, act_dim):
    """One batch tile: 3-layer tanh MLP -> logits, Categorical log_prob packed in lane act_dim."""
    # ---- MLP hot path: MXU matmuls (bf16 in, f32 acc) + f32 tanh ----
    x = obs_ref[...].astype(w1_ref.dtype)                  # in-kernel bf16 cast, K = obs_dim
    h = jnp.tanh(
        jnp.dot(x, w1_ref[...], preferred_element_type=jnp.float32) + b1_ref[...])
    h = jnp.tanh(
        jnp.dot(h.astype(w2_ref.dtype), w2_ref[...],
                preferred_element_type=jnp.float32) + b2_ref[...])
    logits = (
        jnp.dot(h.astype(w3_ref.dtype), w3_ref[...],
                preferred_element_type=jnp.float32) + b3_ref[...])   # [TB, A] f32

    # ---- Categorical(logits).log_prob(act) over the valid lanes ----
    col = jax.lax.broadcasted_iota(jnp.int32, logits.shape, 1)       # [TB, A]
    valid = col < act_dim
    masked = jnp.where(valid, logits, -jnp.inf)
    m = jnp.max(masked, axis=-1, keepdims=True)                      # [TB, 1]
    lse = jnp.log(jnp.sum(jnp.exp(masked - m), axis=-1, keepdims=True))
    # Gather folded into the raw logits (padded lanes are exact zeros and
    # act is assumed to lie in [0, act_dim); not checked in-kernel).
    gathered = jnp.sum(jnp.where(col == act_ref[...], logits, 0.0),
                       axis=-1, keepdims=True)                       # [TB, 1]
    logp = gathered - m - lse

    # Single lane-dense store: logits in lanes [0, act_dim), logp in lane act_dim.
    out_ref[...] = jnp.where(col == act_dim, logp, logits)


def prepare_params(params):
    """One-time (hoist out of the rollout loop) padding + bf16 cast of the MLP params.

    params: [(w1,b1),(w2,b2),(w3,b3)] with weights [in, out] (transposed vs
    PyTorch nn.Linear) and biases [1, out] (or [out]).
    """
    (w1, b1), (w2, b2), (w3, b3) = params
    obs_dim, h1 = w1.shape
    h2 = w2.shape[1]
    act_dim = w3.shape[1]
    H1 = _round_up(h1, 128)
    H2 = _round_up(h2, 128)
    A = _round_up(act_dim + 1, 128)      # +1 guarantees a spare lane for logp

    def pad2(x, shape, dtype):
        out = jnp.zeros(shape, dtype)
        return out.at[:x.shape[0], :x.shape[1]].set(x.astype(dtype))

    bf16, f32 = jnp.bfloat16, jnp.float32
    w1p = pad2(w1, (obs_dim, H1), bf16)              # contraction dim left unpadded
    b1p = pad2(jnp.reshape(b1, (1, -1)), (1, H1), f32)
    w2p = pad2(w2, (H1, H2), bf16)
    b2p = pad2(jnp.reshape(b2, (1, -1)), (1, H2), f32)
    w3p = pad2(w3, (H2, A), bf16)
    b3p = pad2(jnp.reshape(b3, (1, -1)), (1, A), f32)
    return (w1p, b1p, w2p, b2p, w3p, b3p, act_dim)


def mlp_categorical_policy_forward(obs, prepped, act, *, tile_b=2048):
    """Returns (logits, logp_a); `logits` plays the role of the Categorical `pi`.

    `prepped` comes from prepare_params(...).  `act` must lie in [0, act_dim).
    """
    w1p, b1p, w2p, b2p, w3p, b3p, act_dim = prepped
    B, obs_dim = obs.shape
    A = w3p.shape[1]
    TB, n_steps = _choose_tiles(B, tile_b)

    act2 = jnp.reshape(act, (B, 1)).astype(jnp.int32)

    def row_spec(shape):
        return pl.BlockSpec(shape, lambda i: (i, 0))    # tiled along batch
    def resident(shape):
        return pl.BlockSpec(shape, lambda i: (0, 0))    # same block every step

    kernel = functools.partial(_policy_kernel, act_dim=act_dim)

    out = pl.pallas_call(
        kernel,
        out_shape=jax.ShapeDtypeStruct((B, A), jnp.float32),
        grid=(n_steps,),
        in_specs=[
            row_spec((TB, obs_dim)),     # obs tile, unpadded lanes
            row_spec((TB, 1)),           # act tile
            resident(w1p.shape), resident(b1p.shape),
            resident(w2p.shape), resident(b2p.shape),
            resident(w3p.shape), resident(b3p.shape),
        ],
        out_specs=row_spec((TB, A)),
        compiler_params=pltpu.CompilerParams(
            dimension_semantics=("parallel",)),          # megacore split on v7x
    )(obs, act2, w1p, b1p, w2p, b2p, w3p, b3p)

    # Lanes [0, act_dim) are the logits, lane act_dim is logp(act).
    return out[:, :act_dim], out[:, act_dim]


def init_params(key, sizes):
    """Deterministic params; Linear weights stored as [in, out], biases as [1, out]."""
    params = []
    for i in range(len(sizes) - 1):
        fan_in, fan_out = sizes[i], sizes[i + 1]
        key, kw, kb = jax.random.split(key, 3)
        bound = 1.0 / jnp.sqrt(fan_in)
        w = jax.random.uniform(kw, (fan_in, fan_out), jnp.float32, -bound, bound)
        b = jax.random.uniform(kb, (1, fan_out), jnp.float32, -bound, bound)
        params.append((w, b))
    return params


def _reference(obs, params, act):
    """Pure-JAX reference with the same bf16-in / f32-acc matmul recipe."""
    (w1, b1), (w2, b2), (w3, b3) = params
    bf = jnp.bfloat16
    h = jnp.tanh(jnp.dot(obs.astype(bf), w1.astype(bf),
                         preferred_element_type=jnp.float32) + b1)
    h = jnp.tanh(jnp.dot(h.astype(bf), w2.astype(bf),
                         preferred_element_type=jnp.float32) + b2)
    logits = jnp.dot(h.astype(bf), w3.astype(bf),
                     preferred_element_type=jnp.float32) + b3
    logp = jax.nn.log_softmax(logits, axis=-1)[jnp.arange(obs.shape[0]), act]
    return logits, logp


if __name__ == "__main__":
    key = jax.random.PRNGKey(0)

    # sizes = [obs_dim, hidden, hidden, act_dim]
    sizes = [16, 32, 32, 4]
    batch = 8

    kp, ko, ka = jax.random.split(key, 3)
    params = init_params(kp, sizes)
    obs = jax.random.normal(ko, (batch, sizes[0]), jnp.float32)
    act = jax.random.randint(ka, (batch,), 0, sizes[-1], jnp.int32)

    prepped = prepare_params(params)   # one-time prep, hoisted out of the hot path
    logits, logp_a = mlp_categorical_policy_forward(obs, prepped, act)
    jax.block_until_ready((logits, logp_a))

    ref_logits, ref_logp = _reference(obs, params, act)
    assert jnp.allclose(logits, ref_logits, atol=1e-3, rtol=1e-3)
    assert jnp.allclose(logp_a, ref_logp, atol=1e-3, rtol=1e-3)

    # TODO(synk): Categorical sampling (pi.sample()) stays on the host/JAX side;
    # the kernel returns the distribution's logits and log_prob(act) only.
    # TODO(synk): act >= act_dim is not validated in-kernel (would silently pick a
    # padded lane); add pl.debug_check under pl.enable_debug_checks for dev builds.
    print("KERNEL_OK")
</pallas_src>

<mosaic_0001>
module attributes {stable_mosaic.version = 11 : i64} {
  func.func @_policy_kernel(%arg0: i32, %arg1: memref<8x16xf32, #tpu.memory_space<vmem>>, %arg2: memref<8x1xi32, #tpu.memory_space<vmem>>, %arg3: memref<16x128xbf16, #tpu.memory_space<vmem>>, %arg4: memref<1x128xf32, #tpu.memory_space<vmem>>, %arg5: memref<128x128xbf16, #tpu.memory_space<vmem>>, %arg6: memref<1x128xf32, #tpu.memory_space<vmem>>, %arg7: memref<128x128xbf16, #tpu.memory_space<vmem>>, %arg8: memref<1x128xf32, #tpu.memory_space<vmem>>, %arg9: memref<8x128xf32, #tpu.memory_space<vmem>>) attributes {dimension_semantics = [#tpu.dimension_semantics<parallel>], iteration_bounds = array<i64: 1>, scalar_prefetch = 0 : i64, scratch_operands = 0 : i64, tpu.core_type = #tpu.core_type<tc>, window_params = [{transform_indices = @transform_0, window_bounds = array<i64: 8, 16>}, {transform_indices = @transform_1, window_bounds = array<i64: 8, 1>}, {pipeline_mode = #tpu.pipeline_mode<synchronous>, transform_indices = @transform_2, window_bounds = array<i64: 16, 128>}, {pipeline_mode = #tpu.pipeline_mode<synchronous>, transform_indices = @transform_3, window_bounds = array<i64: 1, 128>}, {pipeline_mode = #tpu.pipeline_mode<synchronous>, transform_indices = @transform_4, window_bounds = array<i64: 128, 128>}, {pipeline_mode = #tpu.pipeline_mode<synchronous>, transform_indices = @transform_5, window_bounds = array<i64: 1, 128>}, {pipeline_mode = #tpu.pipeline_mode<synchronous>, transform_indices = @transform_6, window_bounds = array<i64: 128, 128>}, {pipeline_mode = #tpu.pipeline_mode<synchronous>, transform_indices = @transform_7, window_bounds = array<i64: 1, 128>}, {transform_indices = @transform_8, window_bounds = array<i64: 8, 128>}]} {
    %c0 = arith.constant 0 : index
    %c0_0 = arith.constant 0 : index
    %0 = vector.load %arg1[%c0, %c0_0] : memref<8x16xf32, #tpu.memory_space<vmem>>, vector<8x16xf32>
    %1 = arith.truncf %0 : vector<8x16xf32> to vector<8x16xbf16>
    %c0_1 = arith.constant 0 : index
    %c0_2 = arith.constant 0 : index
    %2 = vector.load %arg3[%c0_1, %c0_2] : memref<16x128xbf16, #tpu.memory_space<vmem>>, vector<16x128xbf16>
    %cst = arith.constant dense<0.000000e+00> : vector<8x128xf32>
    %3 = tpu.matmul %1, %2, %cst {dimension_numbers = #tpu.dot_dimension_numbers<[1], [0], [0], [1], [0, 0, 1, 1], [], []>} : vector<8x16xbf16>, vector<16x128xbf16>, vector<8x128xf32> -> vector<8x128xf32>
    %c0_3 = arith.constant 0 : index
    %c0_4 = arith.constant 0 : index
    %4 = vector.load %arg4[%c0_3, %c0_4] : memref<1x128xf32, #tpu.memory_space<vmem>>, vector<1x128xf32>
    %5 = vector.broadcast %4 : vector<1x128xf32> to vector<8x128xf32>
    %6 = arith.addf %3, %5 : vector<8x128xf32>
    %7 = math.tanh %6 : vector<8x128xf32>
    %8 = arith.truncf %7 : vector<8x128xf32> to vector<8x128xbf16>
    %c0_5 = arith.constant 0 : index
    %c0_6 = arith.constant 0 : index
    %9 = vector.load %arg5[%c0_5, %c0_6] : memref<128x128xbf16, #tpu.memory_space<vmem>>, vector<128x128xbf16>
    %cst_7 = arith.constant dense<0.000000e+00> : vector<8x128xf32>
    %10 = tpu.matmul %8, %9, %cst_7 {dimension_numbers = #tpu.dot_dimension_numbers<[1], [0], [0], [1], [0, 0, 1, 1], [], []>} : vector<8x128xbf16>, vector<128x128xbf16>, vector<8x128xf32> -> vector<8x128xf32>
    %c0_8 = arith.constant 0 : index
    %c0_9 = arith.constant 0 : index
    %11 = vector.load %arg6[%c0_8, %c0_9] : memref<1x128xf32, #tpu.memory_space<vmem>>, vector<1x128xf32>
    %12 = vector.broadcast %11 : vector<1x128xf32> to vector<8x128xf32>
    %13 = arith.addf %10, %12 : vector<8x128xf32>
    %14 = math.tanh %13 : vector<8x128xf32>
    %15 = arith.truncf %14 : vector<8x128xf32> to vector<8x128xbf16>
    %c0_10 = arith.constant 0 : index
    %c0_11 = arith.constant 0 : index
    %16 = vector.load %arg7[%c0_10, %c0_11] : memref<128x128xbf16, #tpu.memory_space<vmem>>, vector<128x128xbf16>
    %cst_12 = arith.constant dense<0.000000e+00> : vector<8x128xf32>
    %17 = tpu.matmul %15, %16, %cst_12 {dimension_numbers = #tpu.dot_dimension_numbers<[1], [0], [0], [1], [0, 0, 1, 1], [], []>} : vector<8x128xbf16>, vector<128x128xbf16>, vector<8x128xf32> -> vector<8x128xf32>
    %c0_13 = arith.constant 0 : index
    %c0_14 = arith.constant 0 : index
    %18 = vector.load %arg8[%c0_13, %c0_14] : memref<1x128xf32, #tpu.memory_space<vmem>>, vector<1x128xf32>
    %19 = vector.broadcast %18 : vector<1x128xf32> to vector<8x128xf32>
    %20 = arith.addf %17, %19 : vector<8x128xf32>
    %21 = tpu.iota {dimensions = array<i32: 1>} : vector<8x128xi32>
    %c4_i32 = arith.constant 4 : i32
    %22 = vector.broadcast %c4_i32 : i32 to vector<8x128xi32>
    %23 = arith.cmpi slt, %21, %22 : vector<8x128xi32>
    %cst_15 = arith.constant 0xFF800000 : f32
    %24 = vector.broadcast %cst_15 : f32 to vector<8x128xf32>
    %25 = arith.select %23, %20, %24 : vector<8x128xi1>, vector<8x128xf32>
    %cst_16 = arith.constant dense<0xFF800000> : vector<8xf32>
    %26 = vector.multi_reduction <maximumf>, %25, %cst_16 [1] : vector<8x128xf32> to vector<8xf32>
    %27 = vector.shape_cast %26 : vector<8xf32> to vector<8x1xf32>
    %28 = vector.broadcast %27 : vector<8x1xf32> to vector<8x128xf32>
    %29 = arith.subf %25, %28 : vector<8x128xf32>
    %30 = math.exp %29 : vector<8x128xf32>
    %cst_17 = arith.constant dense<0.000000e+00> : vector<8xf32>
    %31 = vector.multi_reduction <add>, %30, %cst_17 [1] : vector<8x128xf32> to vector<8xf32>
    %32 = vector.shape_cast %31 : vector<8xf32> to vector<8x1xf32>
    %33 = math.log %32 : vector<8x1xf32>
    %c0_18 = arith.constant 0 : index
    %c0_19 = arith.constant 0 : index
    %34 = vector.load %arg2[%c0_18, %c0_19] : memref<8x1xi32, #tpu.memory_space<vmem>>, vector<8x1xi32>
    %35 = vector.broadcast %34 : vector<8x1xi32> to vector<8x128xi32>
    %36 = arith.cmpi eq, %21, %35 : vector<8x128xi32>
    %cst_20 = arith.constant 0.000000e+00 : f32
    %37 = vector.broadcast %cst_20 : f32 to vector<8x128xf32>
    %38 = arith.select %36, %20, %37 : vector<8x128xi1>, vector<8x128xf32>
    %cst_21 = arith.constant dense<0.000000e+00> : vector<8xf32>
    %39 = vector.multi_reduction <add>, %38, %cst_21 [1] : vector<8x128xf32> to vector<8xf32>
    %40 = vector.shape_cast %39 : vector<8xf32> to vector<8x1xf32>
    %41 = arith.subf %40, %27 : vector<8x1xf32>
    %42 = arith.subf %41, %33 : vector<8x1xf32>
    %c4_i32_22 = arith.constant 4 : i32
    %43 = vector.broadcast %c4_i32_22 : i32 to vector<8x128xi32>
    %44 = arith.cmpi eq, %21, %43 : vector<8x128xi32>
    %45 = vector.shape_cast %42 : vector<8x1xf32> to vector<8x1xf32>
    %46 = vector.broadcast %45 : vector<8x1xf32> to vector<8x128xf32>
    %47 = arith.select %44, %46, %20 : vector<8x128xi1>, vector<8x128xf32>
    %c0_23 = arith.constant 0 : index
    %c0_24 = arith.constant 0 : index
    %48 = vector.load %arg9[%c0_23, %c0_24] : memref<8x128xf32, #tpu.memory_space<vmem>>, vector<8x128xf32>
    tpu.vector_store %arg9[%c0_23, %c0_24], %47 {strides = array<i32>} : memref<8x128xf32, #tpu.memory_space<vmem>>, vector<8x128xf32>,
    return
  }
  func.func @transform_0(%arg0: i32) -> (i32, i32) {
    %c0_i32 = arith.constant 0 : i32
    %c0_i32_0 = arith.constant 0 : i32
    return %arg0, %c0_i32 : i32, i32
  }
  func.func @transform_1(%arg0: i32) -> (i32, i32) {
    %c0_i32 = arith.constant 0 : i32
    %c0_i32_0 = arith.constant 0 : i32
    return %arg0, %c0_i32 : i32, i32
  }
  func.func @transform_2(%arg0: i32) -> (i32, i32) {
    %c0_i32 = arith.constant 0 : i32
    %c0_i32_0 = arith.constant 0 : i32
    %c0_i32_1 = arith.constant 0 : i32
    return %c0_i32, %c0_i32_0 : i32, i32
  }
  func.func @transform_3(%arg0: i32) -> (i32, i32) {
    %c0_i32 = arith.constant 0 : i32
    %c0_i32_0 = arith.constant 0 : i32
    %c0_i32_1 = arith.constant 0 : i32
    return %c0_i32, %c0_i32_0 : i32, i32
  }
  func.func @transform_4(%arg0: i32) -> (i32, i32) {
    %c0_i32 = arith.constant 0 : i32
    %c0_i32_0 = arith.constant 0 : i32
    %c0_i32_1 = arith.constant 0 : i32
    return %c0_i32, %c0_i32_0 : i32, i32
  }
  func.func @transform_5(%arg0: i32) -> (i32, i32) {
    %c0_i32 = arith.constant 0 : i32
    %c0_i32_0 = arith.constant 0 : i32
    %c0_i32_1 = arith.constant 0 : i32
    return %c0_i32, %c0_i32_0 : i32, i32
  }
  func.func @transform_6(%arg0: i32) -> (i32, i32) {
    %c0_i32 = arith.constant 0 : i32
    %c0_i32_0 = arith.constant 0 : i32
    %c0_i32_1 = arith.constant 0 : i32
    return %c0_i32, %c0_i32_0 : i32, i32
  }
  func.func @transform_7(%arg0: i32) -> (i32, i32) {
    %c0_i32 = arith.constant 0 : i32
    %c0_i32_0 = arith.constant 0 : i32
    %c0_i32_1 = arith.constant 0 : i32
    return %c0_i32, %c0_i32_0 : i32, i32
  }
  func.func @transform_8(%arg0: i32) -> (i32, i32) {
    %c0_i32 = arith.constant 0 : i32
    %c0_i32_0 = arith.constant 0 : i32
    return %arg0, %c0_i32 : i32, i32
  }
}

</mosaic_0001>

<llo_original>
// kernel: tpu_custom_call.1
$region0: #{tpu_custom_call.1}
  #allocation0 [shape = 'u32[]', space=smem, size = 0x4, offset = 0x4, fixed_abs, tag = 'smem constant byte address 0x4 - core index']
  #allocation1 [shape = 'u32[144,128]{1,0:T(1,128)}', space=vmem, size = 0x12000, scoped, tag = 'internal scratch']
  %s0 = inlined_call_operand.vmem [shape: f32[8,16], index: 0, kind: input, shape index: {}]
  %s1 = inlined_call_operand.vmem [shape: s32[8,1], index: 1, kind: input, shape index: {}]
  %s2 = inlined_call_operand.vmem [shape: bf16[16,128], index: 2, kind: input, shape index: {}]
  %s3 = inlined_call_operand.vmem [shape: f32[1,128], index: 3, kind: input, shape index: {}]
  %s4 = inlined_call_operand.hbm [shape: bf16[128,128], index: 4, kind: input, shape index: {}]
  %s5 = inlined_call_operand.vmem [shape: f32[1,128], index: 5, kind: input, shape index: {}]
  %s6 = inlined_call_operand.hbm [shape: bf16[128,128], index: 6, kind: input, shape index: {}]
  %s7 = inlined_call_operand.vmem [shape: f32[1,128], index: 7, kind: input, shape index: {}]
  %s8 = inlined_call_operand.hbm [shape: f32[8,128], index: 8, kind: output, shape index: {}]
  %s9 = sld [smem:[#allocation0]]
  $region50: #{tpu_custom_call.1} parent=0
    _
  %s11 = ssub.s32 1, %s9
  %s12 = scalar_select 0, %s11, %s9
  $region1: #{tpu_custom_call.1} parent=0
    #allocation2 [shape = 'u8[32768]{0}', space=vmem, size = 0x8000, scoped, tag = 'input window, operand 4, single buffered']
    #allocation3 [shape = 's32[1]{0}', space=sflag, size = 0x4, scoped, tag = 'scoped memory for tpu_custom_call.1']
    #allocation4 [shape = 's32[1]{0}', space=sflag, size = 0x4, scoped, tag = 'scoped memory for tpu_custom_call.1']
    #allocation5 [shape = 'u8[32768]{0}', space=vmem, size = 0x8000, scoped, tag = 'input window, operand 6, single buffered']
    #allocation6 [shape = 's32[1]{0}', space=sflag, size = 0x4, scoped, tag = 'scoped memory for tpu_custom_call.1']
    #allocation7 [shape = 'u8[4096]{0}', space=vmem, size = 0x1000, scoped, tag = 'output window, operand 0, single buffered']
    %13 = vsyncpa [#allocation3], 0
    %14 = vsyncpa [#allocation6], 0
    %15 = vsyncpa [#allocation4], 0
    // Predicated region
    $region2: #{tpu_custom_call.1} parent=1 // pred_check
      _
    $region3: #{tpu_custom_call.1} parent=1 // pred_check_branch
      %17 = sbr.rel (0) target = $region5
    $region4: #{tpu_custom_call.1} parent=1 // pred_region
      _
    $region5: #{tpu_custom_call.1} parent=1 // pred_fallthru
      _
    // Predicated region
    $region6: #{tpu_custom_call.1} parent=1 // pred_check
      _
    $region7: #{tpu_custom_call.1} parent=1 // pred_check_branch
      %19 = sbr.rel (0) target = $region9
    $region8: #{tpu_custom_call.1} parent=1 // pred_region
      _
    $region9: #{tpu_custom_call.1} parent=1 // pred_fallthru
      _
    // Predicated region
    $region10: #{tpu_custom_call.1} parent=1 // pred_check
      _
    $region11: #{tpu_custom_call.1} parent=1 // pred_check_branch
      %21 = sbr.rel (0) target = $region13
    $region12: #{tpu_custom_call.1} parent=1 // pred_region
      _
    $region13: #{tpu_custom_call.1} parent=1 // pred_fallthru
      _
    // Predicated region
    $region14: #{tpu_custom_call.1} parent=1 // pred_check
      _
    $region15: #{tpu_custom_call.1} parent=1 // pred_check_branch
      %23 = sbr.rel (0) target = $region17
    $region16: #{tpu_custom_call.1} parent=1 // pred_region
      _
    $region17: #{tpu_custom_call.1} parent=1 // pred_fallthru
      _
    // Predicated region
    $region18: #{tpu_custom_call.1} parent=1 // pred_check
      _
    $region19: #{tpu_custom_call.1} parent=1 // pred_check_branch
      %25 = sbr.rel (0) target = $region21
    $region20: #{tpu_custom_call.1} parent=1 // pred_region
      %s27 = ssub.s32 1024, 1024
      %28 = vsyncadd [#allocation3], %s27
      %s29 = sshll.u32 [#allocation2], 4
      %s30 = int_to_ptr.vmem [resolvable:$true] %s29
      %35 = dma.hbm_to_vmem [thread:$0]  %s4, 1024, %s30, [#allocation3], 64, 64, 4
    $region21: #{tpu_custom_call.1} parent=1 // pred_fallthru
      _
    // Predicated region
    $region22: #{tpu_custom_call.1} parent=1 // pred_check
      _
    $region23: #{tpu_custom_call.1} parent=1 // pred_check_branch
      %37 = sbr.rel (0) target = $region25
    $region24: #{tpu_custom_call.1} parent=1 // pred_region
      _
    $region25: #{tpu_custom_call.1} parent=1 // pred_fallthru
      _
    // Predicated region
    $region26: #{tpu_custom_call.1} parent=1 // pred_check
      _
    $region27: #{tpu_custom_call.1} parent=1 // pred_check_branch
      %39 = sbr.rel (0) target = $region29
    $region28: #{tpu_custom_call.1} parent=1 // pred_region
      %s41 = ssub.s32 1024, 1024
      %42 = vsyncadd [#allocation6], %s41
      %s43 = sshll.u32 [#allocation5], 4
      %s44 = int_to_ptr.vmem [resolvable:$true] %s43
      %49 = dma.hbm_to_vmem [thread:$0]  %s6, 1024, %s44, [#allocation6], 64, 64, 4
    $region29: #{tpu_custom_call.1} parent=1 // pred_fallthru
      _
    // Predicated region
    $region30: #{tpu_custom_call.1} parent=1 // pred_check
      _
    $region31: #{tpu_custom_call.1} parent=1 // pred_check_branch
      %51 = sbr.rel (0) target = $region33
    $region32: #{tpu_custom_call.1} parent=1 // pred_region
      _
    $region33: #{tpu_custom_call.1} parent=1 // pred_fallthru
      _
    // Predicated region
    $region34: #{tpu_custom_call.1} parent=1 // pred_check
      _
    $region35: #{tpu_custom_call.1} parent=1 // pred_check_branch
      %53 = sbr.rel (0) target = $region37
    $region36: #{tpu_custom_call.1} parent=1 // pred_region
      %54 = dma.done [#allocation3], 1024
    $region37: #{tpu_custom_call.1} parent=1 // pred_fallthru
      _
    // Predicated region
    $region38: #{tpu_custom_call.1} parent=1 // pred_check
      _
    $region39: #{tpu_custom_call.1} parent=1 // pred_check_branch
      %56 = sbr.rel (0) target = $region41
    $region40: #{tpu_custom_call.1} parent=1 // pred_region
      %57 = dma.done [#allocation6], 1024
    $region41: #{tpu_custom_call.1} parent=1 // pred_fallthru
      _
    %v59 = vld [vmem:[%s0] sm:$0xff]
    %v60 = vpack.c.bf16 %v59, %v59
    %v61 = vld [vmem:[%s2] sm:$0xf]
    %v62 = vld [vmem:[%s2 + $0x4] sm:$0xf]
    %v63 = vld [vmem:[%s3] sm:$0x1]
    %v65 = vlaneseq
    %v66 = vshrl.u32 %v65, 7
    %v67 = vsub.s32 0, %v66
    %v68 = vrot.slane %v63, %v67
    %v72 = vunpack.c.l.b16 %v61
    %v73 = vunpack.c.l.b16 %v62
    %v74 = vpack.c.b16 %v73, %v72
    %vm76 = vcmask 130048
    %v78 = vsel %vm76, %v60, 0
    %80 = vmatprep.subr.bf16.mxu0 0
    %81 = vmatpush1.bf16.msra.mxu0 %v74
    %82 = vmatprep.subr.bf16.mxu0 0
    %83 = vmatpush1.bf16.msra.mxu0 0
    %84 = vmatprep.subr.bf16.mxu0 0
    %85 = vmatpush1.bf16.msra.mxu0 0
    %86 = vmatprep.subr.bf16.mxu0 0
    %87 = vmatpush1.bf16.msra.mxu0 0
    %88 = vmatprep.subr.bf16.mxu0 0
    %89 = vmatpush1.bf16.msra.mxu0 0
    %90 = vmatprep.subr.bf16.mxu0 0
    %91 = vmatpush1.bf16.msra.mxu0 0
    %92 = vmatprep.subr.bf16.mxu0 0
    %93 = vmatpush1.bf16.msra.mxu0 0
    %94 = vmatprep.subr.bf16.mxu0 0
    %95 = vmatpush1.bf16.msra.mxu0 0
    %96 = vmatprep.subr.bf16.mxu0 0
    %97 = vmatpush1.bf16.msra.mxu0 0
    %98 = vmatprep.subr.bf16.mxu0 0
    %99 = vmatpush1.bf16.msra.mxu0 0
    %100 = vmatprep.subr.bf16.mxu0 0
    %101 = vmatpush1.bf16.msra.mxu0 0
    %102 = vmatprep.subr.bf16.mxu0 0
    %103 = vmatpush1.bf16.msra.mxu0 0
    %104 = vmatprep.subr.bf16.mxu0 0
    %105 = vmatpush1.bf16.msra.mxu0 0
    %106 = vmatprep.subr.bf16.mxu0 0
    %107 = vmatpush1.bf16.msra.mxu0 0
    %108 = vmatprep.subr.bf16.mxu0 0
    %109 = vmatpush1.bf16.msra.mxu0 0
    %110 = vmatprep.subr.bf16.mxu0 0
    %111 = vmatpush1.bf16.msra.mxu0 0
    %112 = vmatprep.mubr.bf16.mxu0 0
    %113 = vmatmul.mubr.bf16.gmra.mrb[0].mxu0 %v78
    %v114 = vpop.f32.mrb[0].mxu0
    %v115 = vadd.f32 %v68, %v114
    %v116 = vpop.f32.mrb[0].mxu0
    %v117 = vpop.f32.mrb[0].mxu0
    %v118 = vpop.f32.mrb[0].mxu0
    %119 = vdwg.mxu0
    %v120 = vtanh.pop %v115
    %v121 = vpack.c.bf16 %v120, %v120
    %v122 = vld [vmem:[#allocation2] sm:$0xf]
    %v123 = vld [vmem:[#allocation2 + $0x4] sm:$0xf]
    %v124 = vld [vmem:[#allocation2 + $0x8] sm:$0xf]
    %v125 = vld [vmem:[#allocation2 + $0xc] sm:$0xf]
    %v126 = vld [vmem:[#allocation2 + $0x10] sm:$0xf]
    %v127 = vld [vmem:[#allocation2 + $0x14] sm:$0xf]
    %v128 = vld [vmem:[#allocation2 + $0x18] sm:$0xf]
    %v129 = vld [vmem:[#allocation2 + $0x1c] sm:$0xf]
    %v130 = vld [vmem:[#allocation2 + $0x20] sm:$0xf]
    %v131 = vld [vmem:[#allocation2 + $0x24] sm:$0xf]
    %v132 = vld [vmem:[#allocation2 + $0x28] sm:$0xf]
    %v133 = vld [vmem:[#allocation2 + $0x2c] sm:$0xf]
    %v134 = vld [vmem:[#allocation2 + $0x30] sm:$0xf]
    %v135 = vld [vmem:[#allocation2 + $0x34] sm:$0xf]
    %v136 = vld [vmem:[#allocation2 + $0x38] sm:$0xf]
    %v137 = vld [vmem:[#allocation2 + $0x3c] sm:$0xf]
    %v138 = vld [vmem:[%s5] sm:$0x1]
    %v140 = vlaneseq
    %v141 = vshrl.u32 %v140, 7
    %v142 = vsub.s32 0, %v141
    %v143 = vrot.slane %v138, %v142
    %v161 = vunpack.c.l.b16 %v122
    %v162 = vunpack.c.l.b16 %v123
    %v163 = vunpack.c.l.b16 %v124
    %v164 = vunpack.c.l.b16 %v125
    %v165 = vunpack.c.l.b16 %v126
    %v166 = vunpack.c.l.b16 %v127
    %v167 = vunpack.c.l.b16 %v128
    %v168 = vunpack.c.l.b16 %v129
    %v169 = vunpack.c.l.b16 %v130
    %v170 = vunpack.c.l.b16 %v131
    %v171 = vunpack.c.l.b16 %v132
    %v172 = vunpack.c.l.b16 %v133
    %v173 = vunpack.c.l.b16 %v134
    %v174 = vunpack.c.l.b16 %v135
    %v175 = vunpack.c.l.b16 %v136
    %v176 = vunpack.c.l.b16 %v137
    %v177 = vpack.c.b16 %v162, %v161
    %v178 = vpack.c.b16 %v164, %v163
    %v179 = vpack.c.b16 %v166, %v165
    %v180 = vpack.c.b16 %v168, %v167
    %v181 = vpack.c.b16 %v170, %v169
    %v182 = vpack.c.b16 %v172, %v171
    %v183 = vpack.c.b16 %v174, %v173
    %v184 = vpack.c.b16 %v176, %v175
    %193 = vmatprep.subr.bf16.mxu0 0
    %194 = vmatpush1.bf16.msra.mxu0 %v177
    %195 = vmatprep.subr.bf16.mxu0 0
    %196 = vmatpush1.bf16.msra.mxu0 %v178
    %197 = vmatprep.subr.bf16.mxu0 0
    %198 = vmatpush1.bf16.msra.mxu0 %v179
    %199 = vmatprep.subr.bf16.mxu0 0
    %200 = vmatpush1.bf16.msra.mxu0 %v180
    %201 = vmatprep.subr.bf16.mxu0 0
    %202 = vmatpush1.bf16.msra.mxu0 %v181
    %203 = vmatprep.subr.bf16.mxu0 0
    %204 = vmatpush1.bf16.msra.mxu0 %v182
    %205 = vmatprep.subr.bf16.mxu0 0
    %206 = vmatpush1.bf16.msra.mxu0 %v183
    %207 = vmatprep.subr.bf16.mxu0 0
    %208 = vmatpush1.bf16.msra.mxu0 %v184
    %209 = vmatprep.subr.bf16.mxu0 0
    %210 = vmatpush1.bf16.msra.mxu0 0
    %211 = vmatprep.subr.bf16.mxu0 0
    %212 = vmatpush1.bf16.msra.mxu0 0
    %213 = vmatprep.subr.bf16.mxu0 0
    %214 = vmatpush1.bf16.msra.mxu0 0
    %215 = vmatprep.subr.bf16.mxu0 0
    %216 = vmatpush1.bf16.msra.mxu0 0
    %217 = vmatprep.subr.bf16.mxu0 0
    %218 = vmatpush1.bf16.msra.mxu0 0
    %219 = vmatprep.subr.bf16.mxu0 0
    %220 = vmatpush1.bf16.msra.mxu0 0
    %221 = vmatprep.subr.bf16.mxu0 0
    %222 = vmatpush1.bf16.msra.mxu0 0
    %223 = vmatprep.subr.bf16.mxu0 0
    %224 = vmatpush1.bf16.msra.mxu0 0
    %225 = vmatprep.mubr.bf16.mxu0 0
    %226 = vmatmul.mubr.bf16.gmra.mrb[0].mxu0 %v121
    %v227 = vpop.f32.mrb[0].mxu0
    %v228 = vadd.f32 %v143, %v227
    %v229 = vpop.f32.mrb[0].mxu0
    %v230 = vpop.f32.mrb[0].mxu0
    %v231 = vpop.f32.mrb[0].mxu0
    %232 = vdwg.mxu0
    %v233 = vtanh.pop %v228
    %v234 = vpack.c.bf16 %v233, %v233
    %v235 = vld [vmem:[#allocation5] sm:$0xf]
    %v236 = vld [vmem:[#allocation5 + $0x4] sm:$0xf]
    %v237 = vld [vmem:[#allocation5 + $0x8] sm:$0xf]
    %v238 = vld [vmem:[#allocation5 + $0xc] sm:$0xf]
    %v239 = vld [vmem:[#allocation5 + $0x10] sm:$0xf]
    %v240 = vld [vmem:[#allocation5 + $0x14] sm:$0xf]
    %v241 = vld [vmem:[#allocation5 + $0x18] sm:$0xf]
    %v242 = vld [vmem:[#allocation5 + $0x1c] sm:$0xf]
    %v243 = vld [vmem:[#allocation5 + $0x20] sm:$0xf]
    %v244 = vld [vmem:[#allocation5 + $0x24] sm:$0xf]
    %v245 = vld [vmem:[#allocation5 + $0x28] sm:$0xf]
    %v246 = vld [vmem:[#allocation5 + $0x2c] sm:$0xf]
    %v247 = vld [vmem:[#allocation5 + $0x30] sm:$0xf]
    %v248 = vld [vmem:[#allocation5 + $0x34] sm:$0xf]
    %v249 = vld [vmem:[#allocation5 + $0x38] sm:$0xf]
    %v250 = vld [vmem:[#allocation5 + $0x3c] sm:$0xf]
    %v251 = vld [vmem:[%s7] sm:$0x1]
    %v253 = vlaneseq
    %v254 = vshrl.u32 %v253, 7
    %v255 = vsub.s32 0, %v254
    %v256 = vrot.slane %v251, %v255
    %v274 = vunpack.c.l.b16 %v235
    %v275 = vunpack.c.l.b16 %v236
    %v276 = vunpack.c.l.b16 %v237
    %v277 = vunpack.c.l.b16 %v238
    %v278 = vunpack.c.l.b16 %v239
    %v279 = vunpack.c.l.b16 %v240
    %v280 = vunpack.c.l.b16 %v241
    %v281 = vunpack.c.l.b16 %v242
    %v282 = vunpack.c.l.b16 %v243
    %v283 = vunpack.c.l.b16 %v244
    %v284 = vunpack.c.l.b16 %v245
    %v285 = vunpack.c.l.b16 %v246
    %v286 = vunpack.c.l.b16 %v247
    %v287 = vunpack.c.l.b16 %v248
    %v288 = vunpack.c.l.b16 %v249
    %v289 = vunpack.c.l.b16 %v250
    %v290 = vpack.c.b16 %v275, %v274
    %v291 = vpack.c.b16 %v277, %v276
    %v292 = vpack.c.b16 %v279, %v278
    %v293 = vpack.c.b16 %v281, %v280
    %v294 = vpack.c.b16 %v283, %v282
    %v295 = vpack.c.b16 %v285, %v284
    %v296 = vpack.c.b16 %v287, %v286
    %v297 = vpack.c.b16 %v289, %v288
    %306 = vmatprep.subr.bf16.mxu0 0
    %307 = vmatpush1.bf16.msra.mxu0 %v290
    %308 = vmatprep.subr.bf16.mxu0 0
    %309 = vmatpush1.bf16.msra.mxu0 %v291
    %310 = vmatprep.subr.bf16.mxu0 0
    %311 = vmatpush1.bf16.msra.mxu0 %v292
    %312 = vmatprep.subr.bf16.mxu0 0
    %313 = vmatpush1.bf16.msra.mxu0 %v293
    %314 = vmatprep.subr.bf16.mxu0 0
    %315 = vmatpush1.bf16.msra.mxu0 %v294
    %316 = vmatprep.subr.bf16.mxu0 0
    %317 = vmatpush1.bf16.msra.mxu0 %v295
    %318 = vmatprep.subr.bf16.mxu0 0
    %319 = vmatpush1.bf16.msra.mxu0 %v296
    %320 = vmatprep.subr.bf16.mxu0 0
    %321 = vmatpush1.bf16.msra.mxu0 %v297
    %322 = vmatprep.subr.bf16.mxu0 0
    %323 = vmatpush1.bf16.msra.mxu0 0
    %324 = vmatprep.subr.bf16.mxu0 0
    %325 = vmatpush1.bf16.msra.mxu0 0
    %326 = vmatprep.subr.bf16.mxu0 0
    %327 = vmatpush1.bf16.msra.mxu0 0
    %328 = vmatprep.subr.bf16.mxu0 0
    %329 = vmatpush1.bf16.msra.mxu0 0
    %330 = vmatprep.subr.bf16.mxu0 0
    %331 = vmatpush1.bf16.msra.mxu0 0
    %332 = vmatprep.subr.bf16.mxu0 0
    %333 = vmatpush1.bf16.msra.mxu0 0
    %334 = vmatprep.subr.bf16.mxu0 0
    %335 = vmatpush1.bf16.msra.mxu0 0
    %336 = vmatprep.subr.bf16.mxu0 0
    %337 = vmatpush1.bf16.msra.mxu0 0
    %338 = vmatprep.mubr.bf16.mxu0 0
    %339 = vmatmul.mubr.bf16.gmra.mrb[0].mxu0 %v234
    %v340 = vpop.f32.mrb[0].mxu0
    %v341 = vadd.f32 %v256, %v340
    %v342 = vpop.f32.mrb[0].mxu0
    %v343 = vpop.f32.mrb[0].mxu0
    %v344 = vpop.f32.mrb[0].mxu0
    %345 = vdwg.mxu0
    %v346 = vlaneseq
    %v347 = vand.u32 %v346, 127
    %vm348 = vcmp.lt.s32.totalorder %v347, 4
    %v349 = vsel %vm348, %v341, -inf
    %350 = vmax.xlane.f32.xlu0 %v349
    %v351 = vpop.xlane.xlu0 %350
    %v352 = vsub.f32 %v349, %v351
    %v353 = vmul.f32 %v352, 1.442695
    %v354 = vpow.pop %v353
    %355 = vadd.xlane.f32.xlu0 %v354
    %v356 = vpop.xlane.xlu0 %355
    %v357 = vlog2.pop %v356
    %v358 = vmul.f32 %v357, 0.6931472
    %v359 = vld [vmem:[%s1] sm:$0xff]
    %360 = vset.pattern.permute.xlu0 0
    %361 = vperm.xlu0 %360, %v359
    %v362 = vpop.permute.xlu0 %361
    %vm363 = vcmp.eq.s32.totalorder %v347, %v362
    %v364 = vsel %vm363, %v341, 0.0
    %365 = vadd.xlane.f32.xlu0 %v364
    %v366 = vpop.xlane.xlu0 %365
    %v367 = vsub.f32 %v366, %v351
    %v368 = vsub.f32 %v367, %v358
    %vm369 = vcmp.eq.s32.totalorder %v347, 4
    %v370 = vsel %vm369, %v368, %v341
    %371 = vst [vmem:[#allocation7] sm:$0xff] %v370
    // Predicated region
    $region42: #{tpu_custom_call.1} parent=1 // pred_check
      _
    $region43: #{tpu_custom_call.1} parent=1 // pred_check_branch
      %373 = sbr.rel (0) target = $region45
    $region44: #{tpu_custom_call.1} parent=1 // pred_region
      %s375 = ssub.s32 128, 128
      %376 = vsyncadd [#allocation4], %s375
      %s378 = sshll.u32 [#allocation7], 4
      %s379 = int_to_ptr.vmem [resolvable:$true] %s378
      %381 = dma.vmem_to_hbm [thread:$0]  %s379, 128, %s8, [#allocation4]
    $region45: #{tpu_custom_call.1} parent=1 // pred_fallthru
      _
    // Predicated region
    $region46: #{tpu_custom_call.1} parent=1 // pred_check
      _
    $region47: #{tpu_custom_call.1} parent=1 // pred_check_branch
      %383 = sbr.rel (0) target = $region49
    $region48: #{tpu_custom_call.1} parent=1 // pred_region
      %384 = dma.done [#allocation4], 128
    $region49: #{tpu_custom_call.1} parent=1 // pred_fallthru
      _
    %385 = vsyncpa [#allocation3], 1
    %386 = vsyncpa [#allocation6], 1
    %387 = vsyncpa [#allocation4], 1

</llo_original>
